<compile_context>
chip_gen: v7x
topology: tpu7x:2x2x1
jax: 0.10.0
libtpu: 0.0.40
codegen_flags: <defaults>
</compile_context>

<pallas_src>
import jax
import jax.numpy as jnp
from jax.experimental import pallas as pl
from jax.experimental.pallas import tpu as pltpu

NCLASSES = 20
HIDDEN = 512
LANE = 128


def _round_up(x, m):
    return (x + m - 1) // m * m


# ---------------------------------------------------------------------------
# Pallas kernel: fused  relu(x @ W1 + b1) @ W2p + b2p  for one M tile.
# ---------------------------------------------------------------------------
def _mlp_kernel(x_ref, w1_ref, b1_ref, w2_ref, b2_ref, o_ref):
    # fc1 on the MXU: bf16 operands, f32 accumulation.
    h = jnp.dot(x_ref[...], w1_ref[...], preferred_element_type=jnp.float32)
    h = jnp.maximum(h + b1_ref[...], 0.0)               # bias + ReLU in f32
    # fc2 on the MXU; output columns are pre-padded to a lane-dense width.
    y = jnp.dot(h.astype(w2_ref.dtype), w2_ref[...],
                preferred_element_type=jnp.float32)
    o_ref[...] = (y + b2_ref[...]).astype(o_ref.dtype)


# ---------------------------------------------------------------------------
# Wrapper
# ---------------------------------------------------------------------------
def classifier_forward(params, x, *, block_m=128):
    """x: (B, embedding_dim) -> logits (B, 20)."""
    w1, b1, w2, b2 = params["w1"], params["b1"], params["w2"], params["b2"]
    B, D = x.shape
    H = w1.shape[1]
    C = w2.shape[1]
    CP = _round_up(C, LANE)                    # lane-dense output width (128)

    # Zero-pad fc2 columns so the kernel stores full 128-lane vregs; the extra
    # columns are sliced off after the kernel.
    w2p = jnp.zeros((H, CP), w2.dtype).at[:, :C].set(w2)
    b2p = jnp.zeros((CP,), b2.dtype).at[:C].set(b2)

    # M tiling: 128-row blocks (sublane-aligned), pad the batch if needed.
    tm = min(block_m, _round_up(B, 8))
    Bp = _round_up(B, tm)
    xp = x if Bp == B else jnp.pad(x, ((0, Bp - B), (0, 0)))

    # bf16 MXU operands; biases stay f32 for the epilogue.
    xb = xp.astype(jnp.bfloat16)
    w1b = w1.astype(jnp.bfloat16)
    w2b = w2p.astype(jnp.bfloat16)
    b1r = b1.reshape(1, H).astype(jnp.float32)
    b2r = b2p.reshape(1, CP).astype(jnp.float32)

    # Scoped VMEM derived from the real (double-buffered) block footprint and
    # clamped well below v7x's 64 MiB physical VMEM.
    blk_bytes = 2 * (tm * D * 2 + D * H * 2 + H * 4
                     + H * CP * 2 + CP * 4 + tm * CP * 4)
    vmem_limit = int(min(max(2 * blk_bytes, 4 * 1024 * 1024),
                         48 * 1024 * 1024))

    out = pl.pallas_call(
        _mlp_kernel,
        out_shape=jax.ShapeDtypeStruct((Bp, CP), jnp.float32),
        grid=(Bp // tm,),
        in_specs=[
            pl.BlockSpec((tm, D), lambda i: (i, 0)),
            pl.BlockSpec((D, H), lambda i: (0, 0)),
            pl.BlockSpec((1, H), lambda i: (0, 0)),
            pl.BlockSpec((H, CP), lambda i: (0, 0)),
            pl.BlockSpec((1, CP), lambda i: (0, 0)),
        ],
        out_specs=pl.BlockSpec((tm, CP), lambda i: (i, 0)),
        compiler_params=pltpu.CompilerParams(
            dimension_semantics=("parallel",),
            vmem_limit_bytes=vmem_limit),
    )(xb, w1b, b1r, w2b, b2r)
    return out[:B, :C]


# ---------------------------------------------------------------------------
# Deterministic parameter init (PyTorch nn.Linear default: U(-1/sqrt(fan_in)))
# ---------------------------------------------------------------------------
def init_params(key, embedding_dim):
    k1, k2, k3, k4 = jax.random.split(key, 4)
    lim1 = 1.0 / (embedding_dim ** 0.5)
    lim2 = 1.0 / (HIDDEN ** 0.5)
    w1 = jax.random.uniform(k1, (embedding_dim, HIDDEN), jnp.float32,
                            -lim1, lim1)
    b1 = jax.random.uniform(k2, (HIDDEN,), jnp.float32, -lim1, lim1)
    w2 = jax.random.uniform(k3, (HIDDEN, NCLASSES), jnp.float32, -lim2, lim2)
    b2 = jax.random.uniform(k4, (NCLASSES,), jnp.float32, -lim2, lim2)
    return {"w1": w1, "b1": b1, "w2": w2, "b2": b2}


if __name__ == "__main__":
    EMBED = 256     # embedding_dim
    BATCH = 256     # enough rows to exercise >1 grid step (tm = 128)

    key = jax.random.PRNGKey(0)
    params = init_params(key, EMBED)
    x = jax.random.normal(jax.random.fold_in(key, 99), (BATCH, EMBED),
                          jnp.float32)

    fwd = jax.jit(classifier_forward)
    out = fwd(params, x)
    jax.block_until_ready(out)

    assert out.shape == (BATCH, NCLASSES), out.shape
    assert bool(jnp.all(jnp.isfinite(out)))

    # Reference with the same bf16-operand / f32-accumulate math.
    xb = x.astype(jnp.bfloat16)
    h_ref = jnp.maximum(
        jnp.dot(xb, params["w1"].astype(jnp.bfloat16),
                preferred_element_type=jnp.float32) + params["b1"], 0.0)
    ref = jnp.dot(h_ref.astype(jnp.bfloat16),
                  params["w2"].astype(jnp.bfloat16),
                  preferred_element_type=jnp.float32) + params["b2"]
    assert bool(jnp.allclose(out, ref, rtol=2e-2, atol=2e-2))

    print("KERNEL_OK")
</pallas_src>

<mosaic_0001>
module attributes {stable_mosaic.version = 11 : i64} {
  func.func @_mlp_kernel(%arg0: i32, %arg1: memref<128x256xbf16, #tpu.memory_space<vmem>>, %arg2: memref<256x512xbf16, #tpu.memory_space<vmem>>, %arg3: memref<1x512xf32, #tpu.memory_space<vmem>>, %arg4: memref<512x128xbf16, #tpu.memory_space<vmem>>, %arg5: memref<1x128xf32, #tpu.memory_space<vmem>>, %arg6: memref<128x128xf32, #tpu.memory_space<vmem>>) attributes {dimension_semantics = [#tpu.dimension_semantics<parallel>], iteration_bounds = array<i64: 2>, scalar_prefetch = 0 : i64, scratch_operands = 0 : i64, tpu.core_type = #tpu.core_type<tc>, window_params = [{transform_indices = @transform_0, window_bounds = array<i64: 128, 256>}, {pipeline_mode = #tpu.pipeline_mode<synchronous>, transform_indices = @transform_1, window_bounds = array<i64: 256, 512>}, {pipeline_mode = #tpu.pipeline_mode<synchronous>, transform_indices = @transform_2, window_bounds = array<i64: 1, 512>}, {pipeline_mode = #tpu.pipeline_mode<synchronous>, transform_indices = @transform_3, window_bounds = array<i64: 512, 128>}, {pipeline_mode = #tpu.pipeline_mode<synchronous>, transform_indices = @transform_4, window_bounds = array<i64: 1, 128>}, {transform_indices = @transform_5, window_bounds = array<i64: 128, 128>}]} {
    %c0 = arith.constant 0 : index
    %c0_0 = arith.constant 0 : index
    %0 = vector.load %arg1[%c0, %c0_0] : memref<128x256xbf16, #tpu.memory_space<vmem>>, vector<128x256xbf16>
    %c0_1 = arith.constant 0 : index
    %c0_2 = arith.constant 0 : index
    %1 = vector.load %arg2[%c0_1, %c0_2] : memref<256x512xbf16, #tpu.memory_space<vmem>>, vector<256x512xbf16>
    %cst = arith.constant dense<0.000000e+00> : vector<128x512xf32>
    %2 = tpu.matmul %0, %1, %cst {dimension_numbers = #tpu.dot_dimension_numbers<[1], [0], [0], [1], [0, 0, 1, 1], [], []>} : vector<128x256xbf16>, vector<256x512xbf16>, vector<128x512xf32> -> vector<128x512xf32>
    %c0_3 = arith.constant 0 : index
    %c0_4 = arith.constant 0 : index
    %3 = vector.load %arg3[%c0_3, %c0_4] : memref<1x512xf32, #tpu.memory_space<vmem>>, vector<1x512xf32>
    %4 = vector.broadcast %3 : vector<1x512xf32> to vector<128x512xf32>
    %5 = arith.addf %2, %4 : vector<128x512xf32>
    %cst_5 = arith.constant 0.000000e+00 : f32
    %6 = vector.broadcast %cst_5 : f32 to vector<128x512xf32>
    %7 = arith.maximumf %5, %6 : vector<128x512xf32>
    %8 = arith.truncf %7 : vector<128x512xf32> to vector<128x512xbf16>
    %c0_6 = arith.constant 0 : index
    %c0_7 = arith.constant 0 : index
    %9 = vector.load %arg4[%c0_6, %c0_7] : memref<512x128xbf16, #tpu.memory_space<vmem>>, vector<512x128xbf16>
    %cst_8 = arith.constant dense<0.000000e+00> : vector<128x128xf32>
    %10 = tpu.matmul %8, %9, %cst_8 {dimension_numbers = #tpu.dot_dimension_numbers<[1], [0], [0], [1], [0, 0, 1, 1], [], []>} : vector<128x512xbf16>, vector<512x128xbf16>, vector<128x128xf32> -> vector<128x128xf32>
    %c0_9 = arith.constant 0 : index
    %c0_10 = arith.constant 0 : index
    %11 = vector.load %arg5[%c0_9, %c0_10] : memref<1x128xf32, #tpu.memory_space<vmem>>, vector<1x128xf32>
    %12 = vector.broadcast %11 : vector<1x128xf32> to vector<128x128xf32>
    %13 = arith.addf %10, %12 : vector<128x128xf32>
    %c0_11 = arith.constant 0 : index
    %c0_12 = arith.constant 0 : index
    %14 = vector.load %arg6[%c0_11, %c0_12] : memref<128x128xf32, #tpu.memory_space<vmem>>, vector<128x128xf32>
    tpu.vector_store %arg6[%c0_11, %c0_12], %13 {strides = array<i32>} : memref<128x128xf32, #tpu.memory_space<vmem>>, vector<128x128xf32>,
    return
  }
  func.func @transform_0(%arg0: i32) -> (i32, i32) {
    %c0_i32 = arith.constant 0 : i32
    %c0_i32_0 = arith.constant 0 : i32
    return %arg0, %c0_i32 : i32, i32
  }
  func.func @transform_1(%arg0: i32) -> (i32, i32) {
    %c0_i32 = arith.constant 0 : i32
    %c0_i32_0 = arith.constant 0 : i32
    %c0_i32_1 = arith.constant 0 : i32
    return %c0_i32, %c0_i32_0 : i32, i32
  }
  func.func @transform_2(%arg0: i32) -> (i32, i32) {
    %c0_i32 = arith.constant 0 : i32
    %c0_i32_0 = arith.constant 0 : i32
    %c0_i32_1 = arith.constant 0 : i32
    return %c0_i32, %c0_i32_0 : i32, i32
  }
  func.func @transform_3(%arg0: i32) -> (i32, i32) {
    %c0_i32 = arith.constant 0 : i32
    %c0_i32_0 = arith.constant 0 : i32
    %c0_i32_1 = arith.constant 0 : i32
    return %c0_i32, %c0_i32_0 : i32, i32
  }
  func.func @transform_4(%arg0: i32) -> (i32, i32) {
    %c0_i32 = arith.constant 0 : i32
    %c0_i32_0 = arith.constant 0 : i32
    %c0_i32_1 = arith.constant 0 : i32
    return %c0_i32, %c0_i32_0 : i32, i32
  }
  func.func @transform_5(%arg0: i32) -> (i32, i32) {
    %c0_i32 = arith.constant 0 : i32
    %c0_i32_0 = arith.constant 0 : i32
    return %arg0, %c0_i32 : i32, i32
  }
}

</mosaic_0001>

<llo_original>
// kernel: classifier_forward.1
$region0: #{classifier_forward.1}
  #allocation0 [shape = 'u32[]', space=smem, size = 0x4, offset = 0x4, fixed_abs, tag = 'smem constant byte address 0x4 - core index']
  #allocation1 [shape = 'u32[144,128]{1,0:T(1,128)}', space=vmem, size = 0x12000, scoped, tag = 'internal scratch']
  %s0 = inlined_call_operand.vmem [shape: bf16[256,256], index: 0, kind: input, shape index: {}]
  %s1 = inlined_call_operand.vmem [shape: bf16[256,512], index: 1, kind: input, shape index: {}]
  %s2 = inlined_call_operand.vmem [shape: f32[1,512], index: 2, kind: input, shape index: {}]
  %s3 = inlined_call_operand.vmem [shape: bf16[512,128], index: 3, kind: input, shape index: {}]
  %s4 = inlined_call_operand.vmem [shape: f32[1,128], index: 4, kind: input, shape index: {}]
  %s5 = inlined_call_operand.vmem [shape: f32[256,128], index: 5, kind: output, shape index: {}]
  %s6 = sld [smem:[#allocation0]]
  $region53: #{classifier_forward.1} parent=0
    _
  %s8 = ssub.s32 1, %s6
  %s9 = scalar_select 0, %s8, %s6
  loop: start=0, step=1, limit=4
  $region2: #{classifier_forward.1} parent=0 // loop_pre_header
    _
  $region3: #{classifier_forward.1} parent=0 // loop_header
    %s11 = sphi 0, %s15
    %p12 = scmp.ge.s32.totalorder %s11, 4
    %s21 = sphi 0, %s23
    %s24 = sphi 0, %s21
    %s25 = sphi 0, %s24
    %s41 = sphi 0, %s25
    %s45 = sphi 0, %s45
    %s47 = sphi 0, %s45
    %s48 = sphi 0, %s47
    %s62 = sphi 0, %s48
    %s66 = sphi 0, %s66
    %s68 = sphi 0, %s66
    %s69 = sphi 0, %s68
    %s83 = sphi 0, %s69
    %s87 = sphi 0, %s87
    %s89 = sphi 0, %s87
    %s90 = sphi 0, %s89
    %s104 = sphi 0, %s90
    %s108 = sphi 0, %s108
    %s110 = sphi 0, %s108
    %s111 = sphi 0, %s110
    %s125 = sphi 0, %s111
    %s131 = sphi 0, %s133
    %s134 = sphi 0, %s131
    %s135 = sphi 0, %s134
    %s151 = sphi 0, %s135
  $region4: #{classifier_forward.1} parent=0 // loop_header_branch
    %14 = sbr.rel (%p12) target = $region8
  $region5: #{classifier_forward.1} parent=0 // loop_body
    %s16 = ssub.s32 %s11, 1
    %s17 = ssub.s32 %s11, 2
    %s18 = sadd.s32 %s11, 1
    %s19 = ssub.s32 %s11, %s18
    %p20 = scmp.eq.s32.totalorder %s19, 0
    %s22 = sadd.s32 %s21, 1
    %s23 = scalar_select %p20, %s21, %s22
    %p26 = pneg %p20
    %p27 = scmp.eq.s32.totalorder %s11, 1
    %p28 = por %p26, %p27
    %p29 = scmp.ne.s32.totalorder %s21, %s24
    %p30 = scmp.eq.s32.totalorder %s11, 0
    %p31 = por %p29, %p30
    %p32 = scmp.ne.s32.totalorder %s21, %s24
    %p33 = scmp.eq.s32.totalorder %s16, 1
    %p34 = por %p32, %p33
    %p35 = scmp.ne.s32.totalorder %s24, %s25
    %p36 = scmp.eq.s32.totalorder %s16, 0
    %p37 = por %p35, %p36
    %p38 = scmp.ne.s32.totalorder %s24, %s25
    %p39 = scmp.eq.s32.totalorder %s17, 1
    %p40 = por %p38, %p39
    %p42 = scmp.ne.s32.totalorder %s25, %s41
    %p43 = scmp.eq.s32.totalorder %s17, 0
    %p44 = por %p42, %p43
    %s46 = sadd.s32 %s45, 1
    %p49 = scmp.eq.s32.totalorder %s11, 1
    %p50 = scmp.ne.s32.totalorder %s45, %s47
    %p51 = scmp.eq.s32.totalorder %s11, 0
    %p52 = por %p50, %p51
    %p53 = scmp.ne.s32.totalorder %s45, %s47
    %p54 = scmp.eq.s32.totalorder %s16, 1
    %p55 = por %p53, %p54
    %p56 = scmp.ne.s32.totalorder %s47, %s48
    %p57 = scmp.eq.s32.totalorder %s16, 0
    %p58 = por %p56, %p57
    %p59 = scmp.ne.s32.totalorder %s47, %s48
    %p60 = scmp.eq.s32.totalorder %s17, 1
    %p61 = por %p59, %p60
    %p63 = scmp.ne.s32.totalorder %s48, %s62
    %p64 = scmp.eq.s32.totalorder %s17, 0
    %p65 = por %p63, %p64
    %s67 = sadd.s32 %s66, 1
    %p70 = scmp.eq.s32.totalorder %s11, 1
    %p71 = scmp.ne.s32.totalorder %s66, %s68
    %p72 = scmp.eq.s32.totalorder %s11, 0
    %p73 = por %p71, %p72
    %p74 = scmp.ne.s32.totalorder %s66, %s68
    %p75 = scmp.eq.s32.totalorder %s16, 1
    %p76 = por %p74, %p75
    %p77 = scmp.ne.s32.totalorder %s68, %s69
    %p78 = scmp.eq.s32.totalorder %s16, 0
    %p79 = por %p77, %p78
    %p80 = scmp.ne.s32.totalorder %s68, %s69
    %p81 = scmp.eq.s32.totalorder %s17, 1
    %p82 = por %p80, %p81
    %p84 = scmp.ne.s32.totalorder %s69, %s83
    %p85 = scmp.eq.s32.totalorder %s17, 0
    %p86 = por %p84, %p85
    %s88 = sadd.s32 %s87, 1
    %p91 = scmp.eq.s32.totalorder %s11, 1
    %p92 = scmp.ne.s32.totalorder %s87, %s89
    %p93 = scmp.eq.s32.totalorder %s11, 0
    %p94 = por %p92, %p93
    %p95 = scmp.ne.s32.totalorder %s87, %s89
    %p96 = scmp.eq.s32.totalorder %s16, 1
    %p97 = por %p95, %p96
    %p98 = scmp.ne.s32.totalorder %s89, %s90
    %p99 = scmp.eq.s32.totalorder %s16, 0
    %p100 = por %p98, %p99
    %p101 = scmp.ne.s32.totalorder %s89, %s90
    %p102 = scmp.eq.s32.totalorder %s17, 1
    %p103 = por %p101, %p102
    %p105 = scmp.ne.s32.totalorder %s90, %s104
    %p106 = scmp.eq.s32.totalorder %s17, 0
    %p107 = por %p105, %p106
    %s109 = sadd.s32 %s108, 1
    %p112 = scmp.eq.s32.totalorder %s11, 1
    %p113 = scmp.ne.s32.totalorder %s108, %s110
    %p114 = scmp.eq.s32.totalorder %s11, 0
    %p115 = por %p113, %p114
    %p116 = scmp.ne.s32.totalorder %s108, %s110
    %p117 = scmp.eq.s32.totalorder %s16, 1
    %p118 = por %p116, %p117
    %p119 = scmp.ne.s32.totalorder %s110, %s111
    %p120 = scmp.eq.s32.totalorder %s16, 0
    %p121 = por %p119, %p120
    %p122 = scmp.ne.s32.totalorder %s110, %s111
    %p123 = scmp.eq.s32.totalorder %s17, 1
    %p124 = por %p122, %p123
    %p126 = scmp.ne.s32.totalorder %s111, %s125
    %p127 = scmp.eq.s32.totalorder %s17, 0
    %p128 = por %p126, %p127
    %s129 = ssub.s32 %s11, %s18
    %p130 = scmp.eq.s32.totalorder %s129, 0
    %s132 = sadd.s32 %s131, 1
    %s133 = scalar_select %p130, %s131, %s132
    %p136 = pneg %p130
    %p137 = scmp.eq.s32.totalorder %s11, 1
    %p138 = por %p136, %p137
    %p139 = scmp.ne.s32.totalorder %s131, %s134
    %p140 = scmp.eq.s32.totalorder %s11, 0
    %p141 = por %p139, %p140
    %p142 = scmp.ne.s32.totalorder %s131, %s134
    %p143 = scmp.eq.s32.totalorder %s16, 1
    %p144 = por %p142, %p143
    %p145 = scmp.ne.s32.totalorder %s134, %s135
    %p146 = scmp.eq.s32.totalorder %s16, 0
    %p147 = por %p145, %p146
    %p148 = scmp.ne.s32.totalorder %s134, %s135
    %p149 = scmp.eq.s32.totalorder %s17, 1
    %p150 = por %p148, %p149
    %p152 = scmp.ne.s32.totalorder %s135, %s151
    %p153 = scmp.eq.s32.totalorder %s17, 0
    %p154 = por %p152, %p153
    %p155 = scmp.le.s32.totalorder 1, %s11
    %p156 = scmp.lt.s32.totalorder %s11, 3
    %p157 = pnand %p155, %p156
    %p158 = pneg %p157
    // Predicated region
    $region9: #{classifier_forward.1} parent=5 // pred_check
      _
    $region10: #{classifier_forward.1} parent=5 // pred_check_branch
      %160 = sbr.rel (%p157) target = $region12
    $region11: #{classifier_forward.1} parent=5 // pred_region
      %s161 = ssub.s32 %s11, 1
      // Predicated region
      $region13: #{classifier_forward.1} parent=11 // pred_check
        %p162 = pneg %p58
      $region14: #{classifier_forward.1} parent=11 // pred_check_branch
        %164 = sbr.rel (%p162) target = $region16
      $region15: #{classifier_forward.1} parent=11 // pred_region
        _
      $region16: #{classifier_forward.1} parent=11 // pred_fallthru
        _
      // Predicated region
      $region17: #{classifier_forward.1} parent=11 // pred_check
        %p165 = pneg %p79
      $region18: #{classifier_forward.1} parent=11 // pred_check_branch
        %167 = sbr.rel (%p165) target = $region20
      $region19: #{classifier_forward.1} parent=11 // pred_region
        _
      $region20: #{classifier_forward.1} parent=11 // pred_fallthru
        _
      // Predicated region
      $region21: #{classifier_forward.1} parent=11 // pred_check
        %p168 = pneg %p100
      $region22: #{classifier_forward.1} parent=11 // pred_check_branch
        %170 = sbr.rel (%p168) target = $region24
      $region23: #{classifier_forward.1} parent=11 // pred_region
        _
      $region24: #{classifier_forward.1} parent=11 // pred_fallthru
        _
      // Predicated region
      $region25: #{classifier_forward.1} parent=11 // pred_check
        %p171 = pneg %p121
      $region26: #{classifier_forward.1} parent=11 // pred_check_branch
        %173 = sbr.rel (%p171) target = $region28
      $region27: #{classifier_forward.1} parent=11 // pred_region
        _
      $region28: #{classifier_forward.1} parent=11 // pred_fallthru
        _
    $region12: #{classifier_forward.1} parent=5 // pred_fallthru
      _
    %p174 = scmp.lt.s32.totalorder %s11, 2
    // Predicated region
    $region29: #{classifier_forward.1} parent=5 // pred_check
      %p175 = pneg %p174
    $region30: #{classifier_forward.1} parent=5 // pred_check_branch
      %177 = sbr.rel (%p175) target = $region32
    $region31: #{classifier_forward.1} parent=5 // pred_region
      // Predicated region
      $region33: #{classifier_forward.1} parent=31 // pred_check
        %p178 = pneg %p31
      $region34: #{classifier_forward.1} parent=31 // pred_check_branch
        %180 = sbr.rel (%p178) target = $region36
      $region35: #{classifier_forward.1} parent=31 // pred_region
        %s181 = smul.u32 16, %s11
        %p182 = scmp.lt.s32.totalorder %s181, 31
        %s183 = scalar_select %p182, %s181, 31
        %s184 = smul.addr %s183, 2
        %s185 = smul.addr %s184, 4
        %s186 = scalar_lea.vmem %s0, %s185
        %s187 = smul.u32 16, %s11
      $region36: #{classifier_forward.1} parent=31 // pred_fallthru
        _
    $region32: #{classifier_forward.1} parent=5 // pred_fallthru
      _
    %p188 = scmp.le.s32.totalorder 1, %s11
    %p189 = scmp.lt.s32.totalorder %s11, 3
    %p190 = pnand %p188, %p189
    %p191 = pneg %p190
    // Predicated region
    $region37: #{classifier_forward.1} parent=5 // pred_check
      _
    $region38: #{classifier_forward.1} parent=5 // pred_check_branch
      %193 = sbr.rel (%p190) target = $region40
    $region39: #{classifier_forward.1} parent=5 // pred_region
      %s194 = ssub.s32 %s11, 1
      %s195 = smul.u32 16, %s16
      %p196 = scmp.lt.s32.totalorder %s195, 31
      %s197 = scalar_select %p196, %s195, 31
      %s198 = smul.addr %s197, 2
      %s199 = smul.addr %s198, 4
      %s200 = scalar_lea.vmem %s0, %s199
      %p201 = pneg %p37
      %p202 = pneg %p34
      %p203 = pneg %p58
      %p204 = pneg %p55
      %p205 = pneg %p79
      %p206 = pneg %p76
      %p207 = pneg %p100
      %p208 = pneg %p97
      %p209 = pneg %p121
      %p210 = pneg %p118
      %p211 = pneg %p147
      %p212 = pneg %p144
      %s213 = smul.u32 16, %s16
      %p214 = scmp.lt.s32.totalorder %s213, 31
      %s215 = scalar_select %p214, %s213, 31
      %s216 = smul.addr %s215, 8
      %s217 = scalar_lea.vmem %s5, %s216
      %s218 = smul.u32 16, %s16
      %p219 = scmp.lt.s32.totalorder %s218, 31
      %s220 = scalar_select %p219, %s218, 31
      %s221 = smul.addr %s220, 2
      %s222 = smul.addr %s221, 4
      %s223 = scalar_lea.vmem %s0, %s222
      %s224 = smul.u32 16, %s16
      %s225 = smul.u32 16, %s16
      %p226 = scmp.lt.s32.totalorder %s225, 31
      %s227 = scalar_select %p226, %s225, 31
      %s228 = smul.addr %s227, 8
      %s229 = scalar_lea.vmem %s5, %s228
      %s230 = smul.u32 16, %s16
      %v232 = vld [vmem:[%s223] sm:$0xff]
      %v233 = vld [vmem:[%s223 + $0x8] sm:$0xff]
      %v234 = vld [vmem:[%s223 + $0x10] sm:$0xff]
      %v235 = vld [vmem:[%s223 + $0x18] sm:$0xff]
      %v236 = vld [vmem:[%s223 + $0x20] sm:$0xff]
      %v237 = vld [vmem:[%s223 + $0x28] sm:$0xff]
      %v238 = vld [vmem:[%s223 + $0x30] sm:$0xff]
      %v239 = vld [vmem:[%s223 + $0x38] sm:$0xff]
      %v240 = vld [vmem:[%s223 + $0x40] sm:$0xff]
      %v241 = vld [vmem:[%s223 + $0x48] sm:$0xff]
      %v242 = vld [vmem:[%s223 + $0x50] sm:$0xff]
      %v243 = vld [vmem:[%s223 + $0x58] sm:$0xff]
      %v244 = vld [vmem:[%s223 + $0x60] sm:$0xff]
      %v245 = vld [vmem:[%s223 + $0x68] sm:$0xff]
      %v246 = vld [vmem:[%s223 + $0x70] sm:$0xff]
      %v247 = vld [vmem:[%s223 + $0x78] sm:$0xff]
      %v248 = vld [vmem:[%s1] sm:$0xff]
      %v249 = vld [vmem:[%s1 + $0x8] sm:$0xff]
      %v250 = vld [vmem:[%s1 + $0x10] sm:$0xff]
      %v251 = vld [vmem:[%s1 + $0x18] sm:$0xff]
      %v252 = vld [vmem:[%s1 + $0x20] sm:$0xff]
      %v253 = vld [vmem:[%s1 + $0x28] sm:$0xff]
      %v254 = vld [vmem:[%s1 + $0x30] sm:$0xff]
      %v255 = vld [vmem:[%s1 + $0x38] sm:$0xff]
      %v256 = vld [vmem:[%s1 + $0x40] sm:$0xff]
      %v257 = vld [vmem:[%s1 + $0x48] sm:$0xff]
      %v258 = vld [vmem:[%s1 + $0x50] sm:$0xff]
      %v259 = vld [vmem:[%s1 + $0x58] sm:$0xff]
      %v260 = vld [vmem:[%s1 + $0x60] sm:$0xff]
      %v261 = vld [vmem:[%s1 + $0x68] sm:$0xff]
      %v262 = vld [vmem:[%s1 + $0x70] sm:$0xff]
      %v263 = vld [vmem:[%s1 + $0x78] sm:$0xff]
      %v264 = vld [vmem:[%s1 + $0x80] sm:$0xff]
      %v265 = vld [vmem:[%s1 + $0x88] sm:$0xff]
      %v266 = vld [vmem:[%s1 + $0x90] sm:$0xff]
      %v267 = vld [vmem:[%s1 + $0x98] sm:$0xff]
      %v268 = vld [vmem:[%s1 + $0xa0] sm:$0xff]
      %v269 = vld [vmem:[%s1 + $0xa8] sm:$0xff]
      %v270 = vld [vmem:[%s1 + $0xb0] sm:$0xff]
      %v271 = vld [vmem:[%s1 + $0xb8] sm:$0xff]
      %v272 = vld [vmem:[%s1 + $0xc0] sm:$0xff]
      %v273 = vld [vmem:[%s1 + $0xc8] sm:$0xff]
      %v274 = vld [vmem:[%s1 + $0xd0] sm:$0xff]
      %v275 = vld [vmem:[%s1 + $0xd8] sm:$0xff]
      %v276 = vld [vmem:[%s1 + $0xe0] sm:$0xff]
      %v277 = vld [vmem:[%s1 + $0xe8] sm:$0xff]
      %v278 = vld [vmem:[%s1 + $0xf0] sm:$0xff]
      %v279 = vld [vmem:[%s1 + $0xf8] sm:$0xff]
      %v280 = vld [vmem:[%s1 + $0x100] sm:$0xff]
      %v281 = vld [vmem:[%s1 + $0x108] sm:$0xff]
      %v282 = vld [vmem:[%s1 + $0x110] sm:$0xff]
      %v283 = vld [vmem:[%s1 + $0x118] sm:$0xff]
      %v284 = vld [vmem:[%s1 + $0x120] sm:$0xff]
      %v285 = vld [vmem:[%s1 + $0x128] sm:$0xff]
      %v286 = vld [vmem:[%s1 + $0x130] sm:$0xff]
      %v287 = vld [vmem:[%s1 + $0x138] sm:$0xff]
      %v288 = vld [vmem:[%s1 + $0x140] sm:$0xff]
      %v289 = vld [vmem:[%s1 + $0x148] sm:$0xff]
      %v290 = vld [vmem:[%s1 + $0x150] sm:$0xff]
      %v291 = vld [vmem:[%s1 + $0x158] sm:$0xff]
      %v292 = vld [vmem:[%s1 + $0x160] sm:$0xff]
      %v293 = vld [vmem:[%s1 + $0x168] sm:$0xff]
      %v294 = vld [vmem:[%s1 + $0x170] sm:$0xff]
      %v295 = vld [vmem:[%s1 + $0x178] sm:$0xff]
      %v296 = vld [vmem:[%s1 + $0x180] sm:$0xff]
      %v297 = vld [vmem:[%s1 + $0x188] sm:$0xff]
      %v298 = vld [vmem:[%s1 + $0x190] sm:$0xff]
      %v299 = vld [vmem:[%s1 + $0x198] sm:$0xff]
      %v300 = vld [vmem:[%s1 + $0x1a0] sm:$0xff]
      %v301 = vld [vmem:[%s1 + $0x1a8] sm:$0xff]
      %v302 = vld [vmem:[%s1 + $0x1b0] sm:$0xff]
      %v303 = vld [vmem:[%s1 + $0x1b8] sm:$0xff]
      %v304 = vld [vmem:[%s1 + $0x1c0] sm:$0xff]
      %v305 = vld [vmem:[%s1 + $0x1c8] sm:$0xff]
      %v306 = vld [vmem:[%s1 + $0x1d0] sm:$0xff]
      %v307 = vld [vmem:[%s1 + $0x1d8] sm:$0xff]
      %v308 = vld [vmem:[%s1 + $0x1e0] sm:$0xff]
      %v309 = vld [vmem:[%s1 + $0x1e8] sm:$0xff]
      %v310 = vld [vmem:[%s1 + $0x1f0] sm:$0xff]
      %v311 = vld [vmem:[%s1 + $0x1f8] sm:$0xff]
      %v312 = vld [vmem:[%s2] sm:$0xf]
      %v314 = vlaneseq
      %v315 = vshrl.u32 %v314, 7
      %v316 = vsub.s32 0, %v315
      %v317 = vrot.slane %v312, %v316
      %v318 = vlaneseq
      %v319 = vshrl.u32 %v318, 7
      %v320 = vsub.s32 1, %v319
      %v321 = vrot.slane %v312, %v320
      %v322 = vlaneseq
      %v323 = vshrl.u32 %v322, 7
      %v324 = vsub.s32 2, %v323
      %v325 = vrot.slane %v312, %v324
      %v326 = vlaneseq
      %v327 = vshrl.u32 %v326, 7
      %v328 = vsub.s32 3, %v327
      %v329 = vrot.slane %v312, %v328
      %v350 = vunpack.c.l.b16 %v232
      %v351 = vunpack.c.h.b16 %v232
      %v352 = vunpack.c.l.b16 %v233
      %v353 = vunpack.c.h.b16 %v233
      %v354 = vunpack.c.l.b16 %v234
      %v355 = vunpack.c.h.b16 %v234
      %v356 = vunpack.c.l.b16 %v235
      %v357 = vunpack.c.h.b16 %v235
      %v358 = vunpack.c.l.b16 %v236
      %v359 = vunpack.c.h.b16 %v236
      %v360 = vunpack.c.l.b16 %v237
      %v361 = vunpack.c.h.b16 %v237
      %v362 = vunpack.c.l.b16 %v238
      %v363 = vunpack.c.h.b16 %v238
      %v364 = vunpack.c.l.b16 %v239
      %v365 = vunpack.c.h.b16 %v239
      %v366 = vunpack.c.l.b16 %v240
      %v367 = vunpack.c.h.b16 %v240
      %v368 = vunpack.c.l.b16 %v241
      %v369 = vunpack.c.h.b16 %v241
      %v370 = vunpack.c.l.b16 %v242
      %v371 = vunpack.c.h.b16 %v242
      %v372 = vunpack.c.l.b16 %v243
      %v373 = vunpack.c.h.b16 %v243
      %v374 = vunpack.c.l.b16 %v244
      %v375 = vunpack.c.h.b16 %v244
      %v376 = vunpack.c.l.b16 %v245
      %v377 = vunpack.c.h.b16 %v245
      %v378 = vunpack.c.l.b16 %v246
      %v379 = vunpack.c.h.b16 %v246
      %v380 = vunpack.c.l.b16 %v247
      %v381 = vunpack.c.h.b16 %v247
      %v382 = vpack.c.b16 %v352, %v350
      %v383 = vpack.c.b16 %v353, %v351
      %v384 = vpack.c.b16 %v356, %v354
      %v385 = vpack.c.b16 %v357, %v355
      %v386 = vpack.c.b16 %v360, %v358
      %v387 = vpack.c.b16 %v361, %v359
      %v388 = vpack.c.b16 %v364, %v362
      %v389 = vpack.c.b16 %v365, %v363
      %v390 = vpack.c.b16 %v368, %v366
      %v391 = vpack.c.b16 %v369, %v367
      %v392 = vpack.c.b16 %v372, %v370
      %v393 = vpack.c.b16 %v373, %v371
      %v394 = vpack.c.b16 %v376, %v374
      %v395 = vpack.c.b16 %v377, %v375
      %v396 = vpack.c.b16 %v380, %v378
      %v397 = vpack.c.b16 %v381, %v379
      %v478 = vunpack.c.l.b16 %v248
      %v479 = vunpack.c.h.b16 %v248
      %v480 = vunpack.c.l.b16 %v249
      %v481 = vunpack.c.h.b16 %v249
      %v482 = vunpack.c.l.b16 %v250
      %v483 = vunpack.c.h.b16 %v250
      %v484 = vunpack.c.l.b16 %v251
      %v485 = vunpack.c.h.b16 %v251
      %v486 = vunpack.c.l.b16 %v252
      %v487 = vunpack.c.h.b16 %v252
      %v488 = vunpack.c.l.b16 %v253
      %v489 = vunpack.c.h.b16 %v253
      %v490 = vunpack.c.l.b16 %v254
      %v491 = vunpack.c.h.b16 %v254
      %v492 = vunpack.c.l.b16 %v255
      %v493 = vunpack.c.h.b16 %v255
      %v494 = vunpack.c.l.b16 %v256
      %v495 = vunpack.c.h.b16 %v256
      %v496 = vunpack.c.l.b16 %v257
      %v497 = vunpack.c.h.b16 %v257
      %v498 = vunpack.c.l.b16 %v258
      %v499 = vunpack.c.h.b16 %v258
      %v500 = vunpack.c.l.b16 %v259
      %v501 = vunpack.c.h.b16 %v259
      %v502 = vunpack.c.l.b16 %v260
      %v503 = vunpack.c.h.b16 %v260
      %v504 = vunpack.c.l.b16 %v261
      %v505 = vunpack.c.h.b16 %v261
      %v506 = vunpack.c.l.b16 %v262
      %v507 = vunpack.c.h.b16 %v262
      %v508 = vunpack.c.l.b16 %v263
      %v509 = vunpack.c.h.b16 %v263
      %v510 = vunpack.c.l.b16 %v264
      %v511 = vunpack.c.h.b16 %v264
      %v512 = vunpack.c.l.b16 %v265
      %v513 = vunpack.c.h.b16 %v265
      %v514 = vunpack.c.l.b16 %v266
      %v515 = vunpack.c.h.b16 %v266
      %v516 = vunpack.c.l.b16 %v267
      %v517 = vunpack.c.h.b16 %v267
      %v518 = vunpack.c.l.b16 %v268
      %v519 = vunpack.c.h.b16 %v268
      %v520 = vunpack.c.l.b16 %v269
      %v521 = vunpack.c.h.b16 %v269
      %v522 = vunpack.c.l.b16 %v270
      %v523 = vunpack.c.h.b16 %v270
      %v524 = vunpack.c.l.b16 %v271
      %v525 = vunpack.c.h.b16 %v271
      %v526 = vunpack.c.l.b16 %v272
      %v527 = vunpack.c.h.b16 %v272
      %v528 = vunpack.c.l.b16 %v273
      %v529 = vunpack.c.h.b16 %v273
      %v530 = vunpack.c.l.b16 %v274
      %v531 = vunpack.c.h.b16 %v274
      %v532 = vunpack.c.l.b16 %v275
      %v533 = vunpack.c.h.b16 %v275
      %v534 = vunpack.c.l.b16 %v276
      %v535 = vunpack.c.h.b16 %v276
      %v536 = vunpack.c.l.b16 %v277
      %v537 = vunpack.c.h.b16 %v277
      %v538 = vunpack.c.l.b16 %v278
      %v539 = vunpack.c.h.b16 %v278
      %v540 = vunpack.c.l.b16 %v279
      %v541 = vunpack.c.h.b16 %v279
      %v542 = vunpack.c.l.b16 %v280
      %v543 = vunpack.c.h.b16 %v280
      %v544 = vunpack.c.l.b16 %v281
      %v545 = vunpack.c.h.b16 %v281
      %v546 = vunpack.c.l.b16 %v282
      %v547 = vunpack.c.h.b16 %v282
      %v548 = vunpack.c.l.b16 %v283
      %v549 = vunpack.c.h.b16 %v283
      %v550 = vunpack.c.l.b16 %v284
      %v551 = vunpack.c.h.b16 %v284
      %v552 = vunpack.c.l.b16 %v285
      %v553 = vunpack.c.h.b16 %v285
      %v554 = vunpack.c.l.b16 %v286
      %v555 = vunpack.c.h.b16 %v286
      %v556 = vunpack.c.l.b16 %v287
      %v557 = vunpack.c.h.b16 %v287
      %v558 = vunpack.c.l.b16 %v288
      %v559 = vunpack.c.h.b16 %v288
      %v560 = vunpack.c.l.b16 %v289
      %v561 = vunpack.c.h.b16 %v289
      %v562 = vunpack.c.l.b16 %v290
      %v563 = vunpack.c.h.b16 %v290
      %v564 = vunpack.c.l.b16 %v291
      %v565 = vunpack.c.h.b16 %v291
      %v566 = vunpack.c.l.b16 %v292
      %v567 = vunpack.c.h.b16 %v292
      %v568 = vunpack.c.l.b16 %v293
      %v569 = vunpack.c.h.b16 %v293
      %v570 = vunpack.c.l.b16 %v294
      %v571 = vunpack.c.h.b16 %v294
      %v572 = vunpack.c.l.b16 %v295
      %v573 = vunpack.c.h.b16 %v295
      %v574 = vunpack.c.l.b16 %v296
      %v575 = vunpack.c.h.b16 %v296
      %v576 = vunpack.c.l.b16 %v297
      %v577 = vunpack.c.h.b16 %v297
      %v578 = vunpack.c.l.b16 %v298
      %v579 = vunpack.c.h.b16 %v298
      %v580 = vunpack.c.l.b16 %v299
      %v581 = vunpack.c.h.b16 %v299
      %v582 = vunpack.c.l.b16 %v300
      %v583 = vunpack.c.h.b16 %v300
      %v584 = vunpack.c.l.b16 %v301
      %v585 = vunpack.c.h.b16 %v301
      %v586 = vunpack.c.l.b16 %v302
      %v587 = vunpack.c.h.b16 %v302
      %v588 = vunpack.c.l.b16 %v303
      %v589 = vunpack.c.h.b16 %v303
      %v590 = vunpack.c.l.b16 %v304
      %v591 = vunpack.c.h.b16 %v304
      %v592 = vunpack.c.l.b16 %v305
      %v593 = vunpack.c.h.b16 %v305
      %v594 = vunpack.c.l.b16 %v306
      %v595 = vunpack.c.h.b16 %v306
      %v596 = vunpack.c.l.b16 %v307
      %v597 = vunpack.c.h.b16 %v307
      %v598 = vunpack.c.l.b16 %v308
      %v599 = vunpack.c.h.b16 %v308
      %v600 = vunpack.c.l.b16 %v309
      %v601 = vunpack.c.h.b16 %v309
      %v602 = vunpack.c.l.b16 %v310
      %v603 = vunpack.c.h.b16 %v310
      %v604 = vunpack.c.l.b16 %v311
      %v605 = vunpack.c.h.b16 %v311
      %v606 = vpack.c.b16 %v482, %v478
      %v607 = vpack.c.b16 %v483, %v479
      %v608 = vpack.c.b16 %v484, %v480
      %v609 = vpack.c.b16 %v485, %v481
      %v610 = vpack.c.b16 %v490, %v486
      %v611 = vpack.c.b16 %v491, %v487
      %v612 = vpack.c.b16 %v492, %v488
      %v613 = vpack.c.b16 %v493, %v489
      %v614 = vpack.c.b16 %v498, %v494
      %v615 = vpack.c.b16 %v499, %v495
      %v616 = vpack.c.b16 %v500, %v496
      %v617 = vpack.c.b16 %v501, %v497
      %v618 = vpack.c.b16 %v506, %v502
      %v619 = vpack.c.b16 %v507, %v503
      %v620 = vpack.c.b16 %v508, %v504
      %v621 = vpack.c.b16 %v509, %v505
      %v622 = vpack.c.b16 %v514, %v510
      %v623 = vpack.c.b16 %v515, %v511
      %v624 = vpack.c.b16 %v516, %v512
      %v625 = vpack.c.b16 %v517, %v513
      %v626 = vpack.c.b16 %v522, %v518
      %v627 = vpack.c.b16 %v523, %v519
      %v628 = vpack.c.b16 %v524, %v520
      %v629 = vpack.c.b16 %v525, %v521
      %v630 = vpack.c.b16 %v530, %v526
      %v631 = vpack.c.b16 %v531, %v527
      %v632 = vpack.c.b16 %v532, %v528
      %v633 = vpack.c.b16 %v533, %v529
      %v634 = vpack.c.b16 %v538, %v534
      %v635 = vpack.c.b16 %v539, %v535
      %v636 = vpack.c.b16 %v540, %v536
      %v637 = vpack.c.b16 %v541, %v537
      %v638 = vpack.c.b16 %v546, %v542
      %v639 = vpack.c.b16 %v547, %v543
      %v640 = vpack.c.b16 %v548, %v544
      %v641 = vpack.c.b16 %v549, %v545
      %v642 = vpack.c.b16 %v554, %v550
      %v643 = vpack.c.b16 %v555, %v551
      %v644 = vpack.c.b16 %v556, %v552
      %v645 = vpack.c.b16 %v557, %v553
      %v646 = vpack.c.b16 %v562, %v558
      %v647 = vpack.c.b16 %v563, %v559
      %v648 = vpack.c.b16 %v564, %v560
      %v649 = vpack.c.b16 %v565, %v561
      %v650 = vpack.c.b16 %v570, %v566
      %v651 = vpack.c.b16 %v571, %v567
      %v652 = vpack.c.b16 %v572, %v568
      %v653 = vpack.c.b16 %v573, %v569
      %v654 = vpack.c.b16 %v578, %v574
      %v655 = vpack.c.b16 %v579, %v575
      %v656 = vpack.c.b16 %v580, %v576
      %v657 = vpack.c.b16 %v581, %v577
      %v658 = vpack.c.b16 %v586, %v582
      %v659 = vpack.c.b16 %v587, %v583
      %v660 = vpack.c.b16 %v588, %v584
      %v661 = vpack.c.b16 %v589, %v585
      %v662 = vpack.c.b16 %v594, %v590
      %v663 = vpack.c.b16 %v595, %v591
      %v664 = vpack.c.b16 %v596, %v592
      %v665 = vpack.c.b16 %v597, %v593
      %v666 = vpack.c.b16 %v602, %v598
      %v667 = vpack.c.b16 %v603, %v599
      %v668 = vpack.c.b16 %v604, %v600
      %v669 = vpack.c.b16 %v605, %v601
      %734 = vmatprep.subr.bf16.mxu0 %v607
      %735 = vmatpush1.bf16.msra.mxu0 %v606
      %736 = vmatprep.subr.bf16.mxu0 %v611
      %737 = vmatpush1.bf16.msra.mxu0 %v610
      %738 = vmatprep.subr.bf16.mxu0 %v615
      %739 = vmatpush1.bf16.msra.mxu0 %v614
      %740 = vmatprep.subr.bf16.mxu0 %v619
      %741 = vmatpush1.bf16.msra.mxu0 %v618
      %742 = vmatprep.subr.bf16.mxu0 %v623
      %743 = vmatpush1.bf16.msra.mxu0 %v622
      %744 = vmatprep.subr.bf16.mxu0 %v627
      %745 = vmatpush1.bf16.msra.mxu0 %v626
      %746 = vmatprep.subr.bf16.mxu0 %v631
      %747 = vmatpush1.bf16.msra.mxu0 %v630
      %748 = vmatprep.subr.bf16.mxu0 %v635
      %749 = vmatpush1.bf16.msra.mxu0 %v634
      %750 = vmatprep.subr.bf16.mxu0 %v639
      %751 = vmatpush1.bf16.msra.mxu0 %v638
      %752 = vmatprep.subr.bf16.mxu0 %v643
      %753 = vmatpush1.bf16.msra.mxu0 %v642
      %754 = vmatprep.subr.bf16.mxu0 %v647
      %755 = vmatpush1.bf16.msra.mxu0 %v646
      %756 = vmatprep.subr.bf16.mxu0 %v651
      %757 = vmatpush1.bf16.msra.mxu0 %v650
      %758 = vmatprep.subr.bf16.mxu0 %v655
      %759 = vmatpush1.bf16.msra.mxu0 %v654
      %760 = vmatprep.subr.bf16.mxu0 %v659
      %761 = vmatpush1.bf16.msra.mxu0 %v658
      %762 = vmatprep.subr.bf16.mxu0 %v663
      %763 = vmatpush1.bf16.msra.mxu0 %v662
      %764 = vmatprep.subr.bf16.mxu0 %v667
      %765 = vmatpush1.bf16.msra.mxu0 %v666
      %766 = vmatprep.mubr.bf16.mxu0 %v383
      %767 = vmatmul.mubr.bf16.gmra.mrb[0].mxu0 %v382
      %v768 = vpop.f32.mrb[0].mxu0
      %v769 = vadd.f32 %v317, %v768
      %v770 = vpop.f32.mrb[0].mxu0
      %v771 = vadd.f32 %v321, %v770
      %v772 = vpop.f32.mrb[0].mxu0
      %v773 = vadd.f32 %v317, %v772
      %v774 = vpop.f32.mrb[0].mxu0
      %v775 = vadd.f32 %v321, %v774
      %776 = vmatprep.mubr.bf16.mxu0 %v385
      %777 = vmatmul.mubr.bf16.gmra.mrb[0].mxu0 %v384
      %v778 = vpop.f32.mrb[0].mxu0
      %v779 = vadd.f32 %v317, %v778
      %v780 = vpop.f32.mrb[0].mxu0
      %v781 = vadd.f32 %v321, %v780
      %v782 = vpop.f32.mrb[0].mxu0
      %v783 = vadd.f32 %v317, %v782
      %v784 = vpop.f32.mrb[0].mxu0
      %v785 = vadd.f32 %v321, %v784
      %786 = vmatprep.mubr.bf16.mxu0 %v387
      %787 = vmatmul.mubr.bf16.gmra.mrb[0].mxu0 %v386
      %v788 = vpop.f32.mrb[0].mxu0
      %v789 = vadd.f32 %v317, %v788
      %v790 = vpop.f32.mrb[0].mxu0
      %v791 = vadd.f32 %v321, %v790
      %v792 = vpop.f32.mrb[0].mxu0
      %v793 = vadd.f32 %v317, %v792
      %v794 = vpop.f32.mrb[0].mxu0
      %v795 = vadd.f32 %v321, %v794
      %796 = vmatprep.mubr.bf16.mxu0 %v389
      %797 = vmatmul.mubr.bf16.gmra.mrb[0].mxu0 %v388
      %v798 = vpop.f32.mrb[0].mxu0
      %v799 = vadd.f32 %v317, %v798
      %v800 = vpop.f32.mrb[0].mxu0
      %v801 = vadd.f32 %v321, %v800
      %v802 = vpop.f32.mrb[0].mxu0
      %v803 = vadd.f32 %v317, %v802
      %v804 = vpop.f32.mrb[0].mxu0
      %v805 = vadd.f32 %v321, %v804
      %806 = vmatprep.mubr.bf16.mxu0 %v391
      %807 = vmatmul.mubr.bf16.gmra.mrb[0].mxu0 %v390
      %v808 = vpop.f32.mrb[0].mxu0
      %v809 = vadd.f32 %v317, %v808
      %v810 = vpop.f32.mrb[0].mxu0
      %v811 = vadd.f32 %v321, %v810
      %v812 = vpop.f32.mrb[0].mxu0
      %v813 = vadd.f32 %v317, %v812
      %v814 = vpop.f32.mrb[0].mxu0
      %v815 = vadd.f32 %v321, %v814
      %816 = vmatprep.mubr.bf16.mxu0 %v393
      %817 = vmatmul.mubr.bf16.gmra.mrb[0].mxu0 %v392
      %v818 = vpop.f32.mrb[0].mxu0
      %v819 = vadd.f32 %v317, %v818
      %v820 = vpop.f32.mrb[0].mxu0
      %v821 = vadd.f32 %v321, %v820
      %v822 = vpop.f32.mrb[0].mxu0
      %v823 = vadd.f32 %v317, %v822
      %v824 = vpop.f32.mrb[0].mxu0
      %v825 = vadd.f32 %v321, %v824
      %826 = vmatprep.mubr.bf16.mxu0 %v395
      %827 = vmatmul.mubr.bf16.gmra.mrb[0].mxu0 %v394
      %v828 = vpop.f32.mrb[0].mxu0
      %v829 = vadd.f32 %v317, %v828
      %v830 = vpop.f32.mrb[0].mxu0
      %v831 = vadd.f32 %v321, %v830
      %v832 = vpop.f32.mrb[0].mxu0
      %v833 = vadd.f32 %v317, %v832
      %v834 = vpop.f32.mrb[0].mxu0
      %v835 = vadd.f32 %v321, %v834
      %836 = vmatprep.mubr.bf16.mxu0 %v397
      %837 = vmatmul.mubr.bf16.gmra.mrb[0].mxu0 %v396
      %v838 = vpop.f32.mrb[0].mxu0
      %v839 = vadd.f32 %v317, %v838
      %v840 = vpop.f32.mrb[0].mxu0
      %v841 = vadd.f32 %v321, %v840
      %v842 = vpop.f32.mrb[0].mxu0
      %v843 = vadd.f32 %v317, %v842
      %v844 = vpop.f32.mrb[0].mxu0
      %v845 = vadd.f32 %v321, %v844
      %846 = vdwg.mxu0
      %847 = vmatprep.subr.bf16.mxu0 %v609
      %848 = vmatpush1.bf16.msra.mxu0 %v608
      %849 = vmatprep.subr.bf16.mxu0 %v613
      %850 = vmatpush1.bf16.msra.mxu0 %v612
      %851 = vmatprep.subr.bf16.mxu0 %v617
      %852 = vmatpush1.bf16.msra.mxu0 %v616
      %853 = vmatprep.subr.bf16.mxu0 %v621
      %854 = vmatpush1.bf16.msra.mxu0 %v620
      %855 = vmatprep.subr.bf16.mxu0 %v625
      %856 = vmatpush1.bf16.msra.mxu0 %v624
      %857 = vmatprep.subr.bf16.mxu0 %v629
      %858 = vmatpush1.bf16.msra.mxu0 %v628
      %859 = vmatprep.subr.bf16.mxu0 %v633
      %860 = vmatpush1.bf16.msra.mxu0 %v632
      %861 = vmatprep.subr.bf16.mxu0 %v637
      %862 = vmatpush1.bf16.msra.mxu0 %v636
      %863 = vmatprep.subr.bf16.mxu0 %v641
      %864 = vmatpush1.bf16.msra.mxu0 %v640
      %865 = vmatprep.subr.bf16.mxu0 %v645
      %866 = vmatpush1.bf16.msra.mxu0 %v644
      %867 = vmatprep.subr.bf16.mxu0 %v649
      %868 = vmatpush1.bf16.msra.mxu0 %v648
      %869 = vmatprep.subr.bf16.mxu0 %v653
      %870 = vmatpush1.bf16.msra.mxu0 %v652
      %871 = vmatprep.subr.bf16.mxu0 %v657
      %872 = vmatpush1.bf16.msra.mxu0 %v656
      %873 = vmatprep.subr.bf16.mxu0 %v661
      %874 = vmatpush1.bf16.msra.mxu0 %v660
      %875 = vmatprep.subr.bf16.mxu0 %v665
      %876 = vmatpush1.bf16.msra.mxu0 %v664
      %877 = vmatprep.subr.bf16.mxu0 %v669
      %878 = vmatpush1.bf16.msra.mxu0 %v668
      %879 = vmatprep.mubr.bf16.mxu0 %v383
      %880 = vmatmul.mubr.bf16.gmra.mrb[0].mxu0 %v382
      %v881 = vpop.f32.mrb[0].mxu0
      %v882 = vadd.f32 %v325, %v881
      %v883 = vpop.f32.mrb[0].mxu0
      %v884 = vadd.f32 %v329, %v883
      %v885 = vpop.f32.mrb[0].mxu0
      %v886 = vadd.f32 %v325, %v885
      %v887 = vpop.f32.mrb[0].mxu0
      %v888 = vadd.f32 %v329, %v887
      %889 = vmatprep.mubr.bf16.mxu0 %v385
      %890 = vmatmul.mubr.bf16.gmra.mrb[0].mxu0 %v384
      %v891 = vpop.f32.mrb[0].mxu0
      %v892 = vadd.f32 %v325, %v891
      %v893 = vpop.f32.mrb[0].mxu0
      %v894 = vadd.f32 %v329, %v893
      %v895 = vpop.f32.mrb[0].mxu0
      %v896 = vadd.f32 %v325, %v895
      %v897 = vpop.f32.mrb[0].mxu0
      %v898 = vadd.f32 %v329, %v897
      %899 = vmatprep.mubr.bf16.mxu0 %v387
      %900 = vmatmul.mubr.bf16.gmra.mrb[0].mxu0 %v386
      %v901 = vpop.f32.mrb[0].mxu0
      %v902 = vadd.f32 %v325, %v901
      %v903 = vpop.f32.mrb[0].mxu0
      %v904 = vadd.f32 %v329, %v903
      %v905 = vpop.f32.mrb[0].mxu0
      %v906 = vadd.f32 %v325, %v905
      %v907 = vpop.f32.mrb[0].mxu0
      %v908 = vadd.f32 %v329, %v907
      %909 = vmatprep.mubr.bf16.mxu0 %v389
      %910 = vmatmul.mubr.bf16.gmra.mrb[0].mxu0 %v388
      %v911 = vpop.f32.mrb[0].mxu0
      %v912 = vadd.f32 %v325, %v911
      %v913 = vpop.f32.mrb[0].mxu0
      %v914 = vadd.f32 %v329, %v913
      %v915 = vpop.f32.mrb[0].mxu0
      %v916 = vadd.f32 %v325, %v915
      %v917 = vpop.f32.mrb[0].mxu0
      %v918 = vadd.f32 %v329, %v917
      %919 = vmatprep.mubr.bf16.mxu0 %v391
      %920 = vmatmul.mubr.bf16.gmra.mrb[0].mxu0 %v390
      %v921 = vpop.f32.mrb[0].mxu0
      %v922 = vadd.f32 %v325, %v921
      %v923 = vpop.f32.mrb[0].mxu0
      %v924 = vadd.f32 %v329, %v923
      %v925 = vpop.f32.mrb[0].mxu0
      %v926 = vadd.f32 %v325, %v925
      %v927 = vpop.f32.mrb[0].mxu0
      %v928 = vadd.f32 %v329, %v927
      %929 = vmatprep.mubr.bf16.mxu0 %v393
      %930 = vmatmul.mubr.bf16.gmra.mrb[0].mxu0 %v392
      %v931 = vpop.f32.mrb[0].mxu0
      %v932 = vadd.f32 %v325, %v931
      %v933 = vpop.f32.mrb[0].mxu0
      %v934 = vadd.f32 %v329, %v933
      %v935 = vpop.f32.mrb[0].mxu0
      %v936 = vadd.f32 %v325, %v935
      %v937 = vpop.f32.mrb[0].mxu0
      %v938 = vadd.f32 %v329, %v937
      %939 = vmatprep.mubr.bf16.mxu0 %v395
      %940 = vmatmul.mubr.bf16.gmra.mrb[0].mxu0 %v394
      %v941 = vpop.f32.mrb[0].mxu0
      %v942 = vadd.f32 %v325, %v941
      %v943 = vpop.f32.mrb[0].mxu0
      %v944 = vadd.f32 %v329, %v943
      %v945 = vpop.f32.mrb[0].mxu0
      %v946 = vadd.f32 %v325, %v945
      %v947 = vpop.f32.mrb[0].mxu0
      %v948 = vadd.f32 %v329, %v947
      %949 = vmatprep.mubr.bf16.mxu0 %v397
      %950 = vmatmul.mubr.bf16.gmra.mrb[0].mxu0 %v396
      %v951 = vpop.f32.mrb[0].mxu0
      %v952 = vadd.f32 %v325, %v951
      %v953 = vpop.f32.mrb[0].mxu0
      %v954 = vadd.f32 %v329, %v953
      %v955 = vpop.f32.mrb[0].mxu0
      %v956 = vadd.f32 %v325, %v955
      %v957 = vpop.f32.mrb[0].mxu0
      %v958 = vadd.f32 %v329, %v957
      %959 = vdwg.mxu0
      %v960 = vmax.f32 %v769, 0.0
      %v961 = vmax.f32 %v771, 0.0
      %v962 = vmax.f32 %v882, 0.0
      %v963 = vmax.f32 %v884, 0.0
      %v964 = vmax.f32 %v773, 0.0
      %v965 = vmax.f32 %v775, 0.0
      %v966 = vmax.f32 %v886, 0.0
      %v967 = vmax.f32 %v888, 0.0
      %v968 = vmax.f32 %v779, 0.0
      %v969 = vmax.f32 %v781, 0.0
      %v970 = vmax.f32 %v892, 0.0
      %v971 = vmax.f32 %v894, 0.0
      %v972 = vmax.f32 %v783, 0.0
      %v973 = vmax.f32 %v785, 0.0
      %v974 = vmax.f32 %v896, 0.0
      %v975 = vmax.f32 %v898, 0.0
      %v976 = vmax.f32 %v789, 0.0
      %v977 = vmax.f32 %v791, 0.0
      %v978 = vmax.f32 %v902, 0.0
      %v979 = vmax.f32 %v904, 0.0
      %v980 = vmax.f32 %v793, 0.0
      %v981 = vmax.f32 %v795, 0.0
      %v982 = vmax.f32 %v906, 0.0
      %v983 = vmax.f32 %v908, 0.0
      %v984 = vmax.f32 %v799, 0.0
      %v985 = vmax.f32 %v801, 0.0
      %v986 = vmax.f32 %v912, 0.0
      %v987 = vmax.f32 %v914, 0.0
      %v988 = vmax.f32 %v803, 0.0
      %v989 = vmax.f32 %v805, 0.0
      %v990 = vmax.f32 %v916, 0.0
      %v991 = vmax.f32 %v918, 0.0
      %v992 = vmax.f32 %v809, 0.0
      %v993 = vmax.f32 %v811, 0.0
      %v994 = vmax.f32 %v922, 0.0
      %v995 = vmax.f32 %v924, 0.0
      %v996 = vmax.f32 %v813, 0.0
      %v997 = vmax.f32 %v815, 0.0
      %v998 = vmax.f32 %v926, 0.0
      %v999 = vmax.f32 %v928, 0.0
      %v1000 = vmax.f32 %v819, 0.0
      %v1001 = vmax.f32 %v821, 0.0
      %v1002 = vmax.f32 %v932, 0.0
      %v1003 = vmax.f32 %v934, 0.0
      %v1004 = vmax.f32 %v823, 0.0
      %v1005 = vmax.f32 %v825, 0.0
      %v1006 = vmax.f32 %v936, 0.0
      %v1007 = vmax.f32 %v938, 0.0
      %v1008 = vmax.f32 %v829, 0.0
      %v1009 = vmax.f32 %v831, 0.0
      %v1010 = vmax.f32 %v942, 0.0
      %v1011 = vmax.f32 %v944, 0.0
      %v1012 = vmax.f32 %v833, 0.0
      %v1013 = vmax.f32 %v835, 0.0
      %v1014 = vmax.f32 %v946, 0.0
      %v1015 = vmax.f32 %v948, 0.0
      %v1016 = vmax.f32 %v839, 0.0
      %v1017 = vmax.f32 %v841, 0.0
      %v1018 = vmax.f32 %v952, 0.0
      %v1019 = vmax.f32 %v954, 0.0
      %v1020 = vmax.f32 %v843, 0.0
      %v1021 = vmax.f32 %v845, 0.0
      %v1022 = vmax.f32 %v956, 0.0
      %v1023 = vmax.f32 %v958, 0.0
      %v1024 = vpack.c.bf16 %v964, %v960
      %v1025 = vpack.c.bf16 %v965, %v961
      %v1026 = vpack.c.bf16 %v966, %v962
      %v1027 = vpack.c.bf16 %v967, %v963
      %v1028 = vpack.c.bf16 %v972, %v968
      %v1029 = vpack.c.bf16 %v973, %v969
      %v1030 = vpack.c.bf16 %v974, %v970
      %v1031 = vpack.c.bf16 %v975, %v971
      %v1032 = vpack.c.bf16 %v980, %v976
      %v1033 = vpack.c.bf16 %v981, %v977
      %v1034 = vpack.c.bf16 %v982, %v978
      %v1035 = vpack.c.bf16 %v983, %v979
      %v1036 = vpack.c.bf16 %v988, %v984
      %v1037 = vpack.c.bf16 %v989, %v985
      %v1038 = vpack.c.bf16 %v990, %v986
      %v1039 = vpack.c.bf16 %v991, %v987
      %v1040 = vpack.c.bf16 %v996, %v992
      %v1041 = vpack.c.bf16 %v997, %v993
      %v1042 = vpack.c.bf16 %v998, %v994
      %v1043 = vpack.c.bf16 %v999, %v995
      %v1044 = vpack.c.bf16 %v1004, %v1000
      %v1045 = vpack.c.bf16 %v1005, %v1001
      %v1046 = vpack.c.bf16 %v1006, %v1002
      %v1047 = vpack.c.bf16 %v1007, %v1003
      %v1048 = vpack.c.bf16 %v1012, %v1008
      %v1049 = vpack.c.bf16 %v1013, %v1009
      %v1050 = vpack.c.bf16 %v1014, %v1010
      %v1051 = vpack.c.bf16 %v1015, %v1011
      %v1052 = vpack.c.bf16 %v1020, %v1016
      %v1053 = vpack.c.bf16 %v1021, %v1017
      %v1054 = vpack.c.bf16 %v1022, %v1018
      %v1055 = vpack.c.bf16 %v1023, %v1019
      %v1056 = vld [vmem:[%s3] sm:$0xf]
      %v1057 = vld [vmem:[%s3 + $0x4] sm:$0xf]
      %v1058 = vld [vmem:[%s3 + $0x8] sm:$0xf]
      %v1059 = vld [vmem:[%s3 + $0xc] sm:$0xf]
      %v1060 = vld [vmem:[%s3 + $0x10] sm:$0xf]
      %v1061 = vld [vmem:[%s3 + $0x14] sm:$0xf]
      %v1062 = vld [vmem:[%s3 + $0x18] sm:$0xf]
      %v1063 = vld [vmem:[%s3 + $0x1c] sm:$0xf]
      %v1064 = vld [vmem:[%s3 + $0x20] sm:$0xf]
      %v1065 = vld [vmem:[%s3 + $0x24] sm:$0xf]
      %v1066 = vld [vmem:[%s3 + $0x28] sm:$0xf]
      %v1067 = vld [vmem:[%s3 + $0x2c] sm:$0xf]
      %v1068 = vld [vmem:[%s3 + $0x30] sm:$0xf]
      %v1069 = vld [vmem:[%s3 + $0x34] sm:$0xf]
      %v1070 = vld [vmem:[%s3 + $0x38] sm:$0xf]
      %v1071 = vld [vmem:[%s3 + $0x3c] sm:$0xf]
      %v1072 = vld [vmem:[%s3 + $0x40] sm:$0xf]
      %v1073 = vld [vmem:[%s3 + $0x44] sm:$0xf]
      %v1074 = vld [vmem:[%s3 + $0x48] sm:$0xf]
      %v1075 = vld [vmem:[%s3 + $0x4c] sm:$0xf]
      %v1076 = vld [vmem:[%s3 + $0x50] sm:$0xf]
      %v1077 = vld [vmem:[%s3 + $0x54] sm:$0xf]
      %v1078 = vld [vmem:[%s3 + $0x58] sm:$0xf]
      %v1079 = vld [vmem:[%s3 + $0x5c] sm:$0xf]
      %v1080 = vld [vmem:[%s3 + $0x60] sm:$0xf]
      %v1081 = vld [vmem:[%s3 + $0x64] sm:$0xf]
      %v1082 = vld [vmem:[%s3 + $0x68] sm:$0xf]
      %v1083 = vld [vmem:[%s3 + $0x6c] sm:$0xf]
      %v1084 = vld [vmem:[%s3 + $0x70] sm:$0xf]
      %v1085 = vld [vmem:[%s3 + $0x74] sm:$0xf]
      %v1086 = vld [vmem:[%s3 + $0x78] sm:$0xf]
      %v1087 = vld [vmem:[%s3 + $0x7c] sm:$0xf]
      %v1088 = vld [vmem:[%s3 + $0x80] sm:$0xf]
      %v1089 = vld [vmem:[%s3 + $0x84] sm:$0xf]
      %v1090 = vld [vmem:[%s3 + $0x88] sm:$0xf]
      %v1091 = vld [vmem:[%s3 + $0x8c] sm:$0xf]
      %v1092 = vld [vmem:[%s3 + $0x90] sm:$0xf]
      %v1093 = vld [vmem:[%s3 + $0x94] sm:$0xf]
      %v1094 = vld [vmem:[%s3 + $0x98] sm:$0xf]
      %v1095 = vld [vmem:[%s3 + $0x9c] sm:$0xf]
      %v1096 = vld [vmem:[%s3 + $0xa0] sm:$0xf]
      %v1097 = vld [vmem:[%s3 + $0xa4] sm:$0xf]
      %v1098 = vld [vmem:[%s3 + $0xa8] sm:$0xf]
      %v1099 = vld [vmem:[%s3 + $0xac] sm:$0xf]
      %v1100 = vld [vmem:[%s3 + $0xb0] sm:$0xf]
      %v1101 = vld [vmem:[%s3 + $0xb4] sm:$0xf]
      %v1102 = vld [vmem:[%s3 + $0xb8] sm:$0xf]
      %v1103 = vld [vmem:[%s3 + $0xbc] sm:$0xf]
      %v1104 = vld [vmem:[%s3 + $0xc0] sm:$0xf]
      %v1105 = vld [vmem:[%s3 + $0xc4] sm:$0xf]
      %v1106 = vld [vmem:[%s3 + $0xc8] sm:$0xf]
      %v1107 = vld [vmem:[%s3 + $0xcc] sm:$0xf]
      %v1108 = vld [vmem:[%s3 + $0xd0] sm:$0xf]
      %v1109 = vld [vmem:[%s3 + $0xd4] sm:$0xf]
      %v1110 = vld [vmem:[%s3 + $0xd8] sm:$0xf]
      %v1111 = vld [vmem:[%s3 + $0xdc] sm:$0xf]
      %v1112 = vld [vmem:[%s3 + $0xe0] sm:$0xf]
      %v1113 = vld [vmem:[%s3 + $0xe4] sm:$0xf]
      %v1114 = vld [vmem:[%s3 + $0xe8] sm:$0xf]
      %v1115 = vld [vmem:[%s3 + $0xec] sm:$0xf]
      %v1116 = vld [vmem:[%s3 + $0xf0] sm:$0xf]
      %v1117 = vld [vmem:[%s3 + $0xf4] sm:$0xf]
      %v1118 = vld [vmem:[%s3 + $0xf8] sm:$0xf]
      %v1119 = vld [vmem:[%s3 + $0xfc] sm:$0xf]
      %v1120 = vld [vmem:[%s4] sm:$0x1]
      %v1122 = vlaneseq
      %v1123 = vshrl.u32 %v1122, 7
      %v1124 = vsub.s32 0, %v1123
      %v1125 = vrot.slane %v1120, %v1124
      %v1191 = vunpack.c.l.b16 %v1056
      %v1192 = vunpack.c.l.b16 %v1057
      %v1193 = vunpack.c.l.b16 %v1058
      %v1194 = vunpack.c.l.b16 %v1059
      %v1195 = vunpack.c.l.b16 %v1060
      %v1196 = vunpack.c.l.b16 %v1061
      %v1197 = vunpack.c.l.b16 %v1062
      %v1198 = vunpack.c.l.b16 %v1063
      %v1199 = vunpack.c.l.b16 %v1064
      %v1200 = vunpack.c.l.b16 %v1065
      %v1201 = vunpack.c.l.b16 %v1066
      %v1202 = vunpack.c.l.b16 %v1067
      %v1203 = vunpack.c.l.b16 %v1068
      %v1204 = vunpack.c.l.b16 %v1069
      %v1205 = vunpack.c.l.b16 %v1070
      %v1206 = vunpack.c.l.b16 %v1071
      %v1207 = vunpack.c.l.b16 %v1072
      %v1208 = vunpack.c.l.b16 %v1073
      %v1209 = vunpack.c.l.b16 %v1074
      %v1210 = vunpack.c.l.b16 %v1075
      %v1211 = vunpack.c.l.b16 %v1076
      %v1212 = vunpack.c.l.b16 %v1077
      %v1213 = vunpack.c.l.b16 %v1078
      %v1214 = vunpack.c.l.b16 %v1079
      %v1215 = vunpack.c.l.b16 %v1080
      %v1216 = vunpack.c.l.b16 %v1081
      %v1217 = vunpack.c.l.b16 %v1082
      %v1218 = vunpack.c.l.b16 %v1083
      %v1219 = vunpack.c.l.b16 %v1084
      %v1220 = vunpack.c.l.b16 %v1085
      %v1221 = vunpack.c.l.b16 %v1086
      %v1222 = vunpack.c.l.b16 %v1087
      %v1223 = vunpack.c.l.b16 %v1088
      %v1224 = vunpack.c.l.b16 %v1089
      %v1225 = vunpack.c.l.b16 %v1090
      %v1226 = vunpack.c.l.b16 %v1091
      %v1227 = vunpack.c.l.b16 %v1092
      %v1228 = vunpack.c.l.b16 %v1093
      %v1229 = vunpack.c.l.b16 %v1094
      %v1230 = vunpack.c.l.b16 %v1095
      %v1231 = vunpack.c.l.b16 %v1096
      %v1232 = vunpack.c.l.b16 %v1097
      %v1233 = vunpack.c.l.b16 %v1098
      %v1234 = vunpack.c.l.b16 %v1099
      %v1235 = vunpack.c.l.b16 %v1100
      %v1236 = vunpack.c.l.b16 %v1101
      %v1237 = vunpack.c.l.b16 %v1102
      %v1238 = vunpack.c.l.b16 %v1103
      %v1239 = vunpack.c.l.b16 %v1104
      %v1240 = vunpack.c.l.b16 %v1105
      %v1241 = vunpack.c.l.b16 %v1106
      %v1242 = vunpack.c.l.b16 %v1107
      %v1243 = vunpack.c.l.b16 %v1108
      %v1244 = vunpack.c.l.b16 %v1109
      %v1245 = vunpack.c.l.b16 %v1110
      %v1246 = vunpack.c.l.b16 %v1111
      %v1247 = vunpack.c.l.b16 %v1112
      %v1248 = vunpack.c.l.b16 %v1113
      %v1249 = vunpack.c.l.b16 %v1114
      %v1250 = vunpack.c.l.b16 %v1115
      %v1251 = vunpack.c.l.b16 %v1116
      %v1252 = vunpack.c.l.b16 %v1117
      %v1253 = vunpack.c.l.b16 %v1118
      %v1254 = vunpack.c.l.b16 %v1119
      %v1255 = vpack.c.b16 %v1192, %v1191
      %v1256 = vpack.c.b16 %v1194, %v1193
      %v1257 = vpack.c.b16 %v1196, %v1195
      %v1258 = vpack.c.b16 %v1198, %v1197
      %v1259 = vpack.c.b16 %v1200, %v1199
      %v1260 = vpack.c.b16 %v1202, %v1201
      %v1261 = vpack.c.b16 %v1204, %v1203
      %v1262 = vpack.c.b16 %v1206, %v1205
      %v1263 = vpack.c.b16 %v1208, %v1207
      %v1264 = vpack.c.b16 %v1210, %v1209
      %v1265 = vpack.c.b16 %v1212, %v1211
      %v1266 = vpack.c.b16 %v1214, %v1213
      %v1267 = vpack.c.b16 %v1216, %v1215
      %v1268 = vpack.c.b16 %v1218, %v1217
      %v1269 = vpack.c.b16 %v1220, %v1219
      %v1270 = vpack.c.b16 %v1222, %v1221
      %v1271 = vpack.c.b16 %v1224, %v1223
      %v1272 = vpack.c.b16 %v1226, %v1225
      %v1273 = vpack.c.b16 %v1228, %v1227
      %v1274 = vpack.c.b16 %v1230, %v1229
      %v1275 = vpack.c.b16 %v1232, %v1231
      %v1276 = vpack.c.b16 %v1234, %v1233
      %v1277 = vpack.c.b16 %v1236, %v1235
      %v1278 = vpack.c.b16 %v1238, %v1237
      %v1279 = vpack.c.b16 %v1240, %v1239
      %v1280 = vpack.c.b16 %v1242, %v1241
      %v1281 = vpack.c.b16 %v1244, %v1243
      %v1282 = vpack.c.b16 %v1246, %v1245
      %v1283 = vpack.c.b16 %v1248, %v1247
      %v1284 = vpack.c.b16 %v1250, %v1249
      %v1285 = vpack.c.b16 %v1252, %v1251
      %v1286 = vpack.c.b16 %v1254, %v1253
      %1319 = vmatprep.subr.bf16.mxu0 0
      %1320 = vmatpush1.bf16.msra.mxu0 %v1255
      %1321 = vmatprep.subr.bf16.mxu0 0
      %1322 = vmatpush1.bf16.msra.mxu0 %v1256
      %1323 = vmatprep.subr.bf16.mxu0 0
      %1324 = vmatpush1.bf16.msra.mxu0 %v1257
      %1325 = vmatprep.subr.bf16.mxu0 0
      %1326 = vmatpush1.bf16.msra.mxu0 %v1258
      %1327 = vmatprep.subr.bf16.mxu0 0
      %1328 = vmatpush1.bf16.msra.mxu0 %v1259
      %1329 = vmatprep.subr.bf16.mxu0 0
      %1330 = vmatpush1.bf16.msra.mxu0 %v1260
      %1331 = vmatprep.subr.bf16.mxu0 0
      %1332 = vmatpush1.bf16.msra.mxu0 %v1261
      %1333 = vmatprep.subr.bf16.mxu0 0
      %1334 = vmatpush1.bf16.msra.mxu0 %v1262
      %1335 = vmatprep.subr.bf16.mxu0 0
      %1336 = vmatpush1.bf16.msra.mxu0 %v1263
      %1337 = vmatprep.subr.bf16.mxu0 0
      %1338 = vmatpush1.bf16.msra.mxu0 %v1264
      %1339 = vmatprep.subr.bf16.mxu0 0
      %1340 = vmatpush1.bf16.msra.mxu0 %v1265
      %1341 = vmatprep.subr.bf16.mxu0 0
      %1342 = vmatpush1.bf16.msra.mxu0 %v1266
      %1343 = vmatprep.subr.bf16.mxu0 0
      %1344 = vmatpush1.bf16.msra.mxu0 %v1267
      %1345 = vmatprep.subr.bf16.mxu0 0
      %1346 = vmatpush1.bf16.msra.mxu0 %v1268
      %1347 = vmatprep.subr.bf16.mxu0 0
      %1348 = vmatpush1.bf16.msra.mxu0 %v1269
      %1349 = vmatprep.subr.bf16.mxu0 0
      %1350 = vmatpush1.bf16.msra.mxu0 %v1270
      %1351 = vmatprep.mubr.bf16.mxu0 %v1025
      %1352 = vmatmul.mubr.bf16.gmra.mrb[0].mxu0 %v1024
      %v1353 = vpop.f32.mrb[0].mxu0
      %v1354 = vadd.f32 %v1125, %v1353
      %v1355 = vpop.f32.mrb[0].mxu0
      %v1356 = vpop.f32.mrb[0].mxu0
      %v1357 = vadd.f32 %v1125, %v1356
      %v1358 = vpop.f32.mrb[0].mxu0
      %1359 = vmatprep.mubr.bf16.mxu0 %v1029
      %1360 = vmatmul.mubr.bf16.gmra.mrb[0].mxu0 %v1028
      %v1361 = vpop.f32.mrb[0].mxu0
      %v1362 = vadd.f32 %v1125, %v1361
      %v1363 = vpop.f32.mrb[0].mxu0
      %v1364 = vpop.f32.mrb[0].mxu0
      %v1365 = vadd.f32 %v1125, %v1364
      %v1366 = vpop.f32.mrb[0].mxu0
      %1367 = vmatprep.mubr.bf16.mxu0 %v1033
      %1368 = vmatmul.mubr.bf16.gmra.mrb[0].mxu0 %v1032
      %v1369 = vpop.f32.mrb[0].mxu0
      %v1370 = vadd.f32 %v1125, %v1369
      %v1371 = vpop.f32.mrb[0].mxu0
      %v1372 = vpop.f32.mrb[0].mxu0
      %v1373 = vadd.f32 %v1125, %v1372
      %v1374 = vpop.f32.mrb[0].mxu0
      %1375 = vmatprep.mubr.bf16.mxu0 %v1037
      %1376 = vmatmul.mubr.bf16.gmra.mrb[0].mxu0 %v1036
      %v1377 = vpop.f32.mrb[0].mxu0
      %v1378 = vadd.f32 %v1125, %v1377
      %v1379 = vpop.f32.mrb[0].mxu0
      %v1380 = vpop.f32.mrb[0].mxu0
      %v1381 = vadd.f32 %v1125, %v1380
      %v1382 = vpop.f32.mrb[0].mxu0
      %1383 = vmatprep.mubr.bf16.mxu0 %v1041
      %1384 = vmatmul.mubr.bf16.gmra.mrb[0].mxu0 %v1040
      %v1385 = vpop.f32.mrb[0].mxu0
      %v1386 = vadd.f32 %v1125, %v1385
      %v1387 = vpop.f32.mrb[0].mxu0
      %v1388 = vpop.f32.mrb[0].mxu0
      %v1389 = vadd.f32 %v1125, %v1388
      %v1390 = vpop.f32.mrb[0].mxu0
      %1391 = vmatprep.mubr.bf16.mxu0 %v1045
      %1392 = vmatmul.mubr.bf16.gmra.mrb[0].mxu0 %v1044
      %v1393 = vpop.f32.mrb[0].mxu0
      %v1394 = vadd.f32 %v1125, %v1393
      %v1395 = vpop.f32.mrb[0].mxu0
      %v1396 = vpop.f32.mrb[0].mxu0
      %v1397 = vadd.f32 %v1125, %v1396
      %v1398 = vpop.f32.mrb[0].mxu0
      %1399 = vmatprep.mubr.bf16.mxu0 %v1049
      %1400 = vmatmul.mubr.bf16.gmra.mrb[0].mxu0 %v1048
      %v1401 = vpop.f32.mrb[0].mxu0
      %v1402 = vadd.f32 %v1125, %v1401
      %v1403 = vpop.f32.mrb[0].mxu0
      %v1404 = vpop.f32.mrb[0].mxu0
      %v1405 = vadd.f32 %v1125, %v1404
      %v1406 = vpop.f32.mrb[0].mxu0
      %1407 = vmatprep.mubr.bf16.mxu0 %v1053
      %1408 = vmatmul.mubr.bf16.gmra.mrb[0].mxu0 %v1052
      %v1409 = vpop.f32.mrb[0].mxu0
      %v1410 = vadd.f32 %v1125, %v1409
      %v1411 = vpop.f32.mrb[0].mxu0
      %v1412 = vpop.f32.mrb[0].mxu0
      %v1413 = vadd.f32 %v1125, %v1412
      %v1414 = vpop.f32.mrb[0].mxu0
      %1415 = vdwg.mxu0
      %1416 = vmatprep.subr.bf16.mxu0 0
      %1417 = vmatpush1.bf16.msra.mxu0 %v1271
      %1418 = vmatprep.subr.bf16.mxu0 0
      %1419 = vmatpush1.bf16.msra.mxu0 %v1272
      %1420 = vmatprep.subr.bf16.mxu0 0
      %1421 = vmatpush1.bf16.msra.mxu0 %v1273
      %1422 = vmatprep.subr.bf16.mxu0 0
      %1423 = vmatpush1.bf16.msra.mxu0 %v1274
      %1424 = vmatprep.subr.bf16.mxu0 0
      %1425 = vmatpush1.bf16.msra.mxu0 %v1275
      %1426 = vmatprep.subr.bf16.mxu0 0
      %1427 = vmatpush1.bf16.msra.mxu0 %v1276
      %1428 = vmatprep.subr.bf16.mxu0 0
      %1429 = vmatpush1.bf16.msra.mxu0 %v1277
      %1430 = vmatprep.subr.bf16.mxu0 0
      %1431 = vmatpush1.bf16.msra.mxu0 %v1278
      %1432 = vmatprep.subr.bf16.mxu0 0
      %1433 = vmatpush1.bf16.msra.mxu0 %v1279
      %1434 = vmatprep.subr.bf16.mxu0 0
      %1435 = vmatpush1.bf16.msra.mxu0 %v1280
      %1436 = vmatprep.subr.bf16.mxu0 0
      %1437 = vmatpush1.bf16.msra.mxu0 %v1281
      %1438 = vmatprep.subr.bf16.mxu0 0
      %1439 = vmatpush1.bf16.msra.mxu0 %v1282
      %1440 = vmatprep.subr.bf16.mxu0 0
      %1441 = vmatpush1.bf16.msra.mxu0 %v1283
      %1442 = vmatprep.subr.bf16.mxu0 0
      %1443 = vmatpush1.bf16.msra.mxu0 %v1284
      %1444 = vmatprep.subr.bf16.mxu0 0
      %1445 = vmatpush1.bf16.msra.mxu0 %v1285
      %1446 = vmatprep.subr.bf16.mxu0 0
      %1447 = vmatpush1.bf16.msra.mxu0 %v1286
      %1448 = vmatprep.mubr.bf16.mxu0 %v1027
      %1449 = vmatmul.mubr.bf16.gmra.mrb[0].mxu0 %v1026
      %v1450 = vpop.f32.mrb[0].mxu0
      %v1451 = vadd.f32 %v1354, %v1450
      %v1452 = vpop.f32.mrb[0].mxu0
      %v1453 = vpop.f32.mrb[0].mxu0
      %v1454 = vadd.f32 %v1357, %v1453
      %v1455 = vpop.f32.mrb[0].mxu0
      %1456 = vmatprep.mubr.bf16.mxu0 %v1031
      %1457 = vmatmul.mubr.bf16.gmra.mrb[0].mxu0 %v1030
      %v1458 = vpop.f32.mrb[0].mxu0
      %v1459 = vadd.f32 %v1362, %v1458
      %v1460 = vpop.f32.mrb[0].mxu0
      %v1461 = vpop.f32.mrb[0].mxu0
      %v1462 = vadd.f32 %v1365, %v1461
      %v1463 = vpop.f32.mrb[0].mxu0
      %1464 = vmatprep.mubr.bf16.mxu0 %v1035
      %1465 = vmatmul.mubr.bf16.gmra.mrb[0].mxu0 %v1034
      %v1466 = vpop.f32.mrb[0].mxu0
      %v1467 = vadd.f32 %v1370, %v1466
      %v1468 = vpop.f32.mrb[0].mxu0
      %v1469 = vpop.f32.mrb[0].mxu0
      %v1470 = vadd.f32 %v1373, %v1469
      %v1471 = vpop.f32.mrb[0].mxu0
      %1472 = vmatprep.mubr.bf16.mxu0 %v1039
      %1473 = vmatmul.mubr.bf16.gmra.mrb[0].mxu0 %v1038
      %v1474 = vpop.f32.mrb[0].mxu0
      %v1475 = vadd.f32 %v1378, %v1474
      %v1476 = vpop.f32.mrb[0].mxu0
      %v1477 = vpop.f32.mrb[0].mxu0
      %v1478 = vadd.f32 %v1381, %v1477
      %v1479 = vpop.f32.mrb[0].mxu0
      %1480 = vmatprep.mubr.bf16.mxu0 %v1043
      %1481 = vmatmul.mubr.bf16.gmra.mrb[0].mxu0 %v1042
      %v1482 = vpop.f32.mrb[0].mxu0
      %v1483 = vadd.f32 %v1386, %v1482
      %v1484 = vpop.f32.mrb[0].mxu0
      %v1485 = vpop.f32.mrb[0].mxu0
      %v1486 = vadd.f32 %v1389, %v1485
      %v1487 = vpop.f32.mrb[0].mxu0
      %1488 = vmatprep.mubr.bf16.mxu0 %v1047
      %1489 = vmatmul.mubr.bf16.gmra.mrb[0].mxu0 %v1046
      %v1490 = vpop.f32.mrb[0].mxu0
      %v1491 = vadd.f32 %v1394, %v1490
      %v1492 = vpop.f32.mrb[0].mxu0
      %v1493 = vpop.f32.mrb[0].mxu0
      %v1494 = vadd.f32 %v1397, %v1493
      %v1495 = vpop.f32.mrb[0].mxu0
      %1496 = vmatprep.mubr.bf16.mxu0 %v1051
      %1497 = vmatmul.mubr.bf16.gmra.mrb[0].mxu0 %v1050
      %v1498 = vpop.f32.mrb[0].mxu0
      %v1499 = vadd.f32 %v1402, %v1498
      %v1500 = vpop.f32.mrb[0].mxu0
      %v1501 = vpop.f32.mrb[0].mxu0
      %v1502 = vadd.f32 %v1405, %v1501
      %v1503 = vpop.f32.mrb[0].mxu0
      %1504 = vmatprep.mubr.bf16.mxu0 %v1055
      %1505 = vmatmul.mubr.bf16.gmra.mrb[0].mxu0 %v1054
      %v1506 = vpop.f32.mrb[0].mxu0
      %v1507 = vadd.f32 %v1410, %v1506
      %v1508 = vpop.f32.mrb[0].mxu0
      %v1509 = vpop.f32.mrb[0].mxu0
      %v1510 = vadd.f32 %v1413, %v1509
      %v1511 = vpop.f32.mrb[0].mxu0
      %1512 = vdwg.mxu0
      %1513 = vst [vmem:[%s229] sm:$0xff] %v1451
      %1514 = vst [vmem:[%s229 + $0x8] sm:$0xff] %v1454
      %1515 = vst [vmem:[%s229 + $0x10] sm:$0xff] %v1459
      %1516 = vst [vmem:[%s229 + $0x18] sm:$0xff] %v1462
      %1517 = vst [vmem:[%s229 + $0x20] sm:$0xff] %v1467
      %1518 = vst [vmem:[%s229 + $0x28] sm:$0xff] %v1470
      %1519 = vst [vmem:[%s229 + $0x30] sm:$0xff] %v1475
      %1520 = vst [vmem:[%s229 + $0x38] sm:$0xff] %v1478
      %1521 = vst [vmem:[%s229 + $0x40] sm:$0xff] %v1483
      %1522 = vst [vmem:[%s229 + $0x48] sm:$0xff] %v1486
      %1523 = vst [vmem:[%s229 + $0x50] sm:$0xff] %v1491
      %1524 = vst [vmem:[%s229 + $0x58] sm:$0xff] %v1494
      %1525 = vst [vmem:[%s229 + $0x60] sm:$0xff] %v1499
      %1526 = vst [vmem:[%s229 + $0x68] sm:$0xff] %v1502
      %1527 = vst [vmem:[%s229 + $0x70] sm:$0xff] %v1507
      %1528 = vst [vmem:[%s229 + $0x78] sm:$0xff] %v1510
      %s1529 = smul.u32 16, %s16
      %p1530 = scmp.lt.s32.totalorder %s1529, 31
      %s1531 = scalar_select %p1530, %s1529, 31
      %s1532 = smul.addr %s1531, 8
      %s1533 = scalar_lea.vmem %s5, %s1532
      // Predicated region
      $region41: #{classifier_forward.1} parent=39 // pred_check
        %p1534 = pneg %p144
      $region42: #{classifier_forward.1} parent=39 // pred_check_branch
        %1536 = sbr.rel (%p1534) target = $region44
      $region43: #{classifier_forward.1} parent=39 // pred_region
        %s1537 = smul.u32 16, %s16
      $region44: #{classifier_forward.1} parent=39 // pred_fallthru
        _
    $region40: #{classifier_forward.1} parent=5 // pred_fallthru
      _
    %p1538 = scmp.le.s32.totalorder 2, %s11
    // Predicated region
    $region45: #{classifier_forward.1} parent=5 // pred_check
      %p1539 = pneg %p1538
    $region46: #{classifier_forward.1} parent=5 // pred_check_branch
      %1541 = sbr.rel (%p1539) target = $region48
    $region47: #{classifier_forward.1} parent=5 // pred_region
      %s1542 = ssub.s32 %s11, 2
      // Predicated region
      $region49: #{classifier_forward.1} parent=47 // pred_check
        %p1543 = pneg %p150
      $region50: #{classifier_forward.1} parent=47 // pred_check_branch
        %1545 = sbr.rel (%p1543) target = $region52
      $region51: #{classifier_forward.1} parent=47 // pred_region
        %s1546 = smul.u32 16, %s17
        %p1547 = scmp.lt.s32.totalorder %s1546, 31
        %s1548 = scalar_select %p1547, %s1546, 31
        %s1549 = smul.addr %s1548, 8
        %s1550 = scalar_lea.vmem %s5, %s1549
      $region52: #{classifier_forward.1} parent=47 // pred_fallthru
        _
    $region48: #{classifier_forward.1} parent=5 // pred_fallthru
      _
  $region6: #{classifier_forward.1} parent=0 // loop_footer
    %s15 = sadd.s32 1, %s11
  $region7: #{classifier_forward.1} parent=0 // loop_footer_branch
    %10 = sbr.rel target = $region3
  $region8: #{classifier_forward.1} parent=0 // loop_exit
    _

</llo_original>
